<compile_context>
chip_gen: v6e
topology: v6e:2x2x1
jax: 0.10.0
libtpu: 0.0.40
codegen_flags: <defaults>
</compile_context>

<pallas_src>
import functools

import jax
import jax.numpy as jnp
from jax.experimental import pallas as pl
from jax.experimental.pallas import tpu as pltpu

MARGIN = 2.0         # TODO(synk): self.margin is undefined in the PyTorch module; fixed to 2.0
PAIRWISE_EPS = 1e-6  # matches torch.nn.functional.pairwise_distance default eps


def _round_up(x, m):
    return (x + m - 1) // m * m


def _vmem_budgets():
    """(input buffer budget, vmem_limit_bytes), tuned per TPU generation."""
    phys = 128 * 1024 * 1024
    try:
        phys = int(pltpu.get_tpu_info().vmem_capacity_bytes)
    except Exception:
        pass  # conservative fallback: assume 128 MiB (v5e/v6e)
    buffer_budget = min(phys // 4, 32 * 1024 * 1024)   # 32 MiB v5e/v6e, 16 MiB v7x
    vmem_limit = min(phys // 2, 64 * 1024 * 1024)      # 64 MiB v5e/v6e, 32 MiB v7x
    return buffer_budget, vmem_limit


def _choose_tile_b(batch, feat, itemsize, buffer_budget, num_cores_hint=2):
    """Pick a batch tile: dtype-aware sublane multiple, bytes-based cap, sized so
    2 inputs x 2 pipeline buffers fit the per-generation VMEM budget."""
    row_mult = 8 * max(1, 4 // max(itemsize, 1))       # 8 f32, 16 bf16, 32 int8/fp8
    per_row_bytes = 2 * 2 * feat * itemsize + 2 * 4    # 2 inputs x double-buffered (+label)
    tb = buffer_budget // max(per_row_bytes, 1)
    tb = min(tb, 8192)                                 # bytes-based cap, not 1024 rows
    per_core_rows = _round_up(-(-batch // num_cores_hint), row_mult)
    tb = min(tb, per_core_rows)                        # leave work for both cores
    tb = max(row_mult, (tb // row_mult) * row_mult)
    return int(tb)


def _contrastive_loss_kernel(o1_ref, o2_ref, lbl_ref, out_ref, *,
                             batch, tile_b, blocks_per_core, margin, needs_mask):
    i = pl.program_id(1)  # "arbitrary" reduction axis (per-core batch tiles)

    @pl.when(i == 0)
    def _init():
        out_ref[...] = jnp.zeros_like(out_ref)

    # Native-dtype loads, upcast in vregs (keeps HBM traffic at input width).
    o1 = o1_ref[...].astype(jnp.float32)                      # [TB, D]
    o2 = o2_ref[...].astype(jnp.float32)                      # [TB, D]
    lbl = lbl_ref[...].astype(jnp.float32)                    # [TB, 1]

    diff = o1 - o2 + PAIRWISE_EPS                             # pairwise_distance eps
    dist_sq = jnp.sum(diff * diff, axis=-1, keepdims=True)    # [TB, 1]
    dist = jnp.sqrt(dist_sq)                                  # euclidean_distance

    pos_term = (1.0 - lbl) * dist_sq                          # (1-label) * dist^2 (sqrt elided)
    hinge = jnp.maximum(margin - dist, 0.0)                   # clamp(margin - dist, min=0)
    neg_term = lbl * (hinge * hinge)
    per_row = pos_term + neg_term                             # [TB, 1]

    if needs_mask:
        # Mask padded rows of partial tiles and fully-OOB duplicated tiles.
        # Keep this a select (not *0): padded rows may be garbage/NaN.
        c = pl.program_id(0)
        g = c * blocks_per_core + i                           # un-clamped global tile idx
        row = jax.lax.broadcasted_iota(jnp.int32, per_row.shape, 0) + g * tile_b
        per_row = jnp.where(row < batch, per_row, 0.0)

    out_ref[...] += jnp.sum(per_row, keepdims=True)           # resident (1,1) partial sum

    @pl.when(i == pl.num_programs(1) - 1)
    def _finalize():
        out_ref[...] = out_ref[...] * (1.0 / batch)           # scale once, on the last tile


def contrastive_loss2(output1, output2, label, margin=MARGIN, tile_b=None):
    """output1, output2: [B, D] (any float dtype); label: [B] or [B, 1] -> scalar f32."""
    B, D = output1.shape
    label = label.reshape(B, 1).astype(jnp.float32)

    itemsize = max(jnp.dtype(output1.dtype).itemsize, jnp.dtype(output2.dtype).itemsize)
    buffer_budget, vmem_limit = _vmem_budgets()
    if tile_b is None:
        tile_b = _choose_tile_b(B, D, itemsize, buffer_budget)

    total_blocks = pl.cdiv(B, tile_b)
    num_cores = 2 if total_blocks >= 2 else 1          # megacore split (v7x); harmless on 1-TC chips
    blocks_per_core = pl.cdiv(total_blocks, num_cores)
    needs_mask = (num_cores * blocks_per_core * tile_b) != B

    def _row_map(c, i):
        g = jnp.minimum(c * blocks_per_core + i, total_blocks - 1)  # clamp duplicated OOB tiles
        return (g, 0)

    kernel = functools.partial(
        _contrastive_loss_kernel, batch=B, tile_b=tile_b,
        blocks_per_core=blocks_per_core, margin=float(margin), needs_mask=needs_mask)

    bytes_accessed = (B * D * jnp.dtype(output1.dtype).itemsize
                      + B * D * jnp.dtype(output2.dtype).itemsize
                      + B * 4 + num_cores * 4)

    out = pl.pallas_call(
        kernel,
        out_shape=jax.ShapeDtypeStruct((num_cores, 1), jnp.float32),
        grid_spec=pltpu.PrefetchScalarGridSpec(
            num_scalar_prefetch=0,
            grid=(num_cores, blocks_per_core),
            in_specs=[
                pl.BlockSpec((tile_b, D), _row_map),
                pl.BlockSpec((tile_b, D), _row_map),
                pl.BlockSpec((tile_b, 1), _row_map),
            ],
            out_specs=pl.BlockSpec((1, 1), lambda c, i: (c, 0)),
        ),
        compiler_params=pltpu.CompilerParams(
            dimension_semantics=("parallel", "arbitrary"),
            vmem_limit_bytes=vmem_limit,
        ),
        cost_estimate=pl.CostEstimate(
            flops=6 * B * D,
            transcendentals=B,
            bytes_accessed=bytes_accessed,
        ),
    )(output1, output2, label)
    return jnp.sum(out)   # combine per-core partial means


def _reference(output1, output2, label, margin=MARGIN):
    # pure-JAX reference mirroring the intended PyTorch semantics (literal form)
    label = label.reshape(output1.shape[0]).astype(jnp.float32)
    diff = output1.astype(jnp.float32) - output2.astype(jnp.float32) + PAIRWISE_EPS
    dist = jnp.sqrt(jnp.sum(diff * diff, axis=-1))
    return jnp.mean((1.0 - label) * dist ** 2
                    + label * jnp.maximum(margin - dist, 0.0) ** 2)


if __name__ == "__main__":
    key = jax.random.PRNGKey(0)
    k = jax.random.split(key, 9)

    # Case 1: small, single tile, single "core" chunk (no masking compiled in).
    B, D = 8, 32
    o1 = jax.random.normal(k[0], (B, D), dtype=jnp.float32)
    o2 = jax.random.normal(k[1], (B, D), dtype=jnp.float32)
    lbl = jax.random.bernoulli(k[2], 0.5, (B,)).astype(jnp.float32)
    loss = jax.block_until_ready(contrastive_loss2(o1, o2, lbl))
    ref = _reference(o1, o2, lbl)
    assert jnp.allclose(loss, ref, rtol=1e-5, atol=1e-5), (loss, ref)

    # Case 2: forced small tile -> grid (2, 2) with a partial tile AND a
    # duplicated/clamped OOB tile (exercises per-core partials + masking).
    B2, D2, TB2 = 20, 128, 8
    o1b = jax.random.normal(k[3], (B2, D2), dtype=jnp.float32)
    o2b = jax.random.normal(k[4], (B2, D2), dtype=jnp.float32)
    lblb = jax.random.bernoulli(k[5], 0.5, (B2,)).astype(jnp.float32)
    loss2 = jax.block_until_ready(contrastive_loss2(o1b, o2b, lblb, tile_b=TB2))
    ref2 = _reference(o1b, o2b, lblb)
    assert jnp.allclose(loss2, ref2, rtol=1e-5, atol=1e-5), (loss2, ref2)

    # Case 3: bf16 inputs (dtype-aware sublane rounding + in-vreg upcast).
    B3, D3 = 48, 64
    o1c = jax.random.normal(k[6], (B3, D3), dtype=jnp.bfloat16)
    o2c = jax.random.normal(k[7], (B3, D3), dtype=jnp.bfloat16)
    lblc = jax.random.bernoulli(k[8], 0.5, (B3,)).astype(jnp.float32)
    loss3 = jax.block_until_ready(contrastive_loss2(o1c, o2c, lblc))
    ref3 = _reference(o1c, o2c, lblc)
    assert jnp.allclose(loss3, ref3, rtol=1e-5, atol=1e-5), (loss3, ref3)

    print("KERNEL_OK")
</pallas_src>

<mosaic_0001>
module attributes {stable_mosaic.version = 11 : i64} {
  func.func @_contrastive_loss_kernel(%arg0: i32, %arg1: i32, %arg2: memref<8x32xf32, #tpu.memory_space<vmem>>, %arg3: memref<8x32xf32, #tpu.memory_space<vmem>>, %arg4: memref<8x1xf32, #tpu.memory_space<vmem>>, %arg5: memref<1x1xf32, #tpu.memory_space<vmem>>) attributes {dimension_semantics = [#tpu.dimension_semantics<parallel>, #tpu.dimension_semantics<arbitrary>], iteration_bounds = array<i64: 1, 1>, scalar_prefetch = 0 : i64, scratch_operands = 0 : i64, tpu.core_type = #tpu.core_type<tc>, window_params = [{transform_indices = @transform_0, window_bounds = array<i64: 8, 32>}, {transform_indices = @transform_1, window_bounds = array<i64: 8, 32>}, {transform_indices = @transform_2, window_bounds = array<i64: 8, 1>}, {transform_indices = @transform_3, window_bounds = array<i64: 1, 1>}]} {
    %c0_i32 = arith.constant 0 : i32
    %0 = arith.cmpi eq, %arg1, %c0_i32 : i32
    %1 = arith.extui %0 : i1 to i32
    %c0_i32_0 = arith.constant 0 : i32
    %2 = arith.cmpi ne, %1, %c0_i32_0 : i32
    scf.if %2 {
      %cst_17 = arith.constant 0.000000e+00 : f32
      %34 = vector.broadcast %cst_17 : f32 to vector<1x1xf32>
      %c0_18 = arith.constant 0 : index
      %c0_19 = arith.constant 0 : index
      %35 = vector.load %arg5[%c0_18, %c0_19] : memref<1x1xf32, #tpu.memory_space<vmem>>, vector<1x1xf32>
      tpu.vector_store %arg5[%c0_18, %c0_19], %34 {strides = array<i32>} : memref<1x1xf32, #tpu.memory_space<vmem>>, vector<1x1xf32>,
    } else {
    }
    %c0 = arith.constant 0 : index
    %c0_1 = arith.constant 0 : index
    %3 = vector.load %arg2[%c0, %c0_1] : memref<8x32xf32, #tpu.memory_space<vmem>>, vector<8x32xf32>
    %c0_2 = arith.constant 0 : index
    %c0_3 = arith.constant 0 : index
    %4 = vector.load %arg3[%c0_2, %c0_3] : memref<8x32xf32, #tpu.memory_space<vmem>>, vector<8x32xf32>
    %c0_4 = arith.constant 0 : index
    %c0_5 = arith.constant 0 : index
    %5 = vector.load %arg4[%c0_4, %c0_5] : memref<8x1xf32, #tpu.memory_space<vmem>>, vector<8x1xf32>
    %6 = arith.subf %3, %4 : vector<8x32xf32>
    %cst = arith.constant 9.99999997E-7 : f32
    %7 = vector.broadcast %cst : f32 to vector<8x32xf32>
    %8 = arith.addf %6, %7 : vector<8x32xf32>
    %9 = arith.mulf %8, %8 : vector<8x32xf32>
    %cst_6 = arith.constant dense<0.000000e+00> : vector<8xf32>
    %10 = vector.multi_reduction <add>, %9, %cst_6 [1] : vector<8x32xf32> to vector<8xf32>
    %11 = vector.shape_cast %10 : vector<8xf32> to vector<8x1xf32>
    %12 = math.sqrt %11 : vector<8x1xf32>
    %cst_7 = arith.constant 1.000000e+00 : f32
    %13 = vector.broadcast %cst_7 : f32 to vector<8x1xf32>
    %14 = arith.subf %13, %5 : vector<8x1xf32>
    %15 = arith.mulf %14, %11 : vector<8x1xf32>
    %cst_8 = arith.constant 2.000000e+00 : f32
    %16 = vector.broadcast %cst_8 : f32 to vector<8x1xf32>
    %17 = arith.subf %16, %12 : vector<8x1xf32>
    %cst_9 = arith.constant 0.000000e+00 : f32
    %18 = vector.broadcast %cst_9 : f32 to vector<8x1xf32>
    %19 = arith.maximumf %17, %18 : vector<8x1xf32>
    %20 = arith.mulf %19, %19 : vector<8x1xf32>
    %21 = arith.mulf %5, %20 : vector<8x1xf32>
    %22 = arith.addf %15, %21 : vector<8x1xf32>
    %c0_10 = arith.constant 0 : index
    %c0_11 = arith.constant 0 : index
    %23 = vector.load %arg5[%c0_10, %c0_11] : memref<1x1xf32, #tpu.memory_space<vmem>>, vector<1x1xf32>
    %24 = vector.shape_cast %22 : vector<8x1xf32> to vector<1x8x1xf32>
    %cst_12 = arith.constant dense<0.000000e+00> : vector<1xf32>
    %25 = vector.multi_reduction <add>, %24, %cst_12 [1, 2] : vector<1x8x1xf32> to vector<1xf32>
    %26 = vector.shape_cast %25 : vector<1xf32> to vector<1x1x1xf32>
    %27 = vector.extract %26[0, 0, 0] : f32 from vector<1x1x1xf32>
    %28 = vector.broadcast %27 : f32 to vector<1x1xf32>
    %29 = arith.addf %23, %28 : vector<1x1xf32>
    %c0_13 = arith.constant 0 : index
    %c0_14 = arith.constant 0 : index
    %30 = vector.load %arg5[%c0_13, %c0_14] : memref<1x1xf32, #tpu.memory_space<vmem>>, vector<1x1xf32>
    tpu.vector_store %arg5[%c0_13, %c0_14], %29 {strides = array<i32>} : memref<1x1xf32, #tpu.memory_space<vmem>>, vector<1x1xf32>,
    %c0_i32_15 = arith.constant 0 : i32
    %31 = arith.cmpi eq, %arg1, %c0_i32_15 : i32
    %32 = arith.extui %31 : i1 to i32
    %c0_i32_16 = arith.constant 0 : i32
    %33 = arith.cmpi ne, %32, %c0_i32_16 : i32
    scf.if %33 {
      %c0_17 = arith.constant 0 : index
      %c0_18 = arith.constant 0 : index
      %34 = vector.load %arg5[%c0_17, %c0_18] : memref<1x1xf32, #tpu.memory_space<vmem>>, vector<1x1xf32>
      %cst_19 = arith.constant 1.250000e-01 : f32
      %35 = vector.broadcast %cst_19 : f32 to vector<1x1xf32>
      %36 = arith.mulf %34, %35 : vector<1x1xf32>
      %c0_20 = arith.constant 0 : index
      %c0_21 = arith.constant 0 : index
      %37 = vector.load %arg5[%c0_20, %c0_21] : memref<1x1xf32, #tpu.memory_space<vmem>>, vector<1x1xf32>
      tpu.vector_store %arg5[%c0_20, %c0_21], %36 {strides = array<i32>} : memref<1x1xf32, #tpu.memory_space<vmem>>, vector<1x1xf32>,
    } else {
    }
    return
  }
  func.func @transform_0(%arg0: i32, %arg1: i32) -> (i32, i32) {
    %c1_i32 = arith.constant 1 : i32
    %0 = arith.muli %arg0, %c1_i32 : i32
    %1 = arith.addi %0, %arg1 : i32
    %c0_i32 = arith.constant 0 : i32
    %2 = arith.minsi %1, %c0_i32 : i32
    %c0_i32_0 = arith.constant 0 : i32
    %c0_i32_1 = arith.constant 0 : i32
    return %2, %c0_i32_0 : i32, i32
  }
  func.func @transform_1(%arg0: i32, %arg1: i32) -> (i32, i32) {
    %c1_i32 = arith.constant 1 : i32
    %0 = arith.muli %arg0, %c1_i32 : i32
    %1 = arith.addi %0, %arg1 : i32
    %c0_i32 = arith.constant 0 : i32
    %2 = arith.minsi %1, %c0_i32 : i32
    %c0_i32_0 = arith.constant 0 : i32
    %c0_i32_1 = arith.constant 0 : i32
    return %2, %c0_i32_0 : i32, i32
  }
  func.func @transform_2(%arg0: i32, %arg1: i32) -> (i32, i32) {
    %c1_i32 = arith.constant 1 : i32
    %0 = arith.muli %arg0, %c1_i32 : i32
    %1 = arith.addi %0, %arg1 : i32
    %c0_i32 = arith.constant 0 : i32
    %2 = arith.minsi %1, %c0_i32 : i32
    %c0_i32_0 = arith.constant 0 : i32
    %c0_i32_1 = arith.constant 0 : i32
    return %2, %c0_i32_0 : i32, i32
  }
  func.func @transform_3(%arg0: i32, %arg1: i32) -> (i32, i32) {
    %c0_i32 = arith.constant 0 : i32
    %c0_i32_0 = arith.constant 0 : i32
    return %arg0, %c0_i32 : i32, i32
  }
}

</mosaic_0001>

<llo_original>
// kernel: tpu_custom_call.1
$region0: #{tpu_custom_call.1}
  #allocation0 [shape = 'u32[]', space=smem, size = 0x4, offset = 0x4, fixed_abs, tag = 'smem constant byte address 0x4 - core index']
  #allocation1 [shape = 'u32[144,128]{1,0:T(1,128)}', space=vmem, size = 0x12000, scoped, tag = 'internal scratch']
  %s0 = inlined_call_operand.vmem [shape: f32[8,32], index: 0, kind: input, shape index: {}]
  %s1 = inlined_call_operand.hbm [shape: f32[8,32], index: 1, kind: input, shape index: {}]
  %s2 = inlined_call_operand.vmem [shape: f32[8,1], index: 2, kind: input, shape index: {}]
  %s3 = inlined_call_operand.hbm [shape: f32[1,1], index: 3, kind: output, shape index: {}]
  %s4 = sld [smem:[#allocation0]]
  $region34: #{tpu_custom_call.1} parent=0
    _
  %s6 = ssub.s32 1, %s4
  %s7 = scalar_select 0, %s6, %s4
  $region1: #{tpu_custom_call.1} parent=0
    #allocation2 [shape = 'u8[4096]{0}', space=vmem, size = 0x1000, scoped, tag = 'input window, operand 1, single buffered']
    #allocation3 [shape = 's32[1]{0}', space=sflag, size = 0x4, scoped, tag = 'scoped memory for tpu_custom_call.1']
    #allocation4 [shape = 's32[1]{0}', space=sflag, size = 0x4, scoped, tag = 'scoped memory for tpu_custom_call.1']
    #allocation5 [shape = 'u8[512]{0}', space=vmem, size = 0x400, scoped, tag = 'output window, operand 0, single buffered']
    %8 = vsyncpa [#allocation3], 0
    %9 = vsyncpa [#allocation4], 0
    // Predicated region
    $region2: #{tpu_custom_call.1} parent=1 // pred_check
      _
    $region3: #{tpu_custom_call.1} parent=1 // pred_check_branch
      %11 = sbr.rel (0) target = $region5
    $region4: #{tpu_custom_call.1} parent=1 // pred_region
      %s12 = sadd.s32 0, 0
      %p13 = scmp.lt.s32.totalorder %s12, 0
      %s14 = scalar_select %p13, %s12, 0
      %p15 = scmp.lt.s32.totalorder %s14, 0
      %s16 = scalar_select %p15, %s14, 0
      %s17 = smul.addr %s16, 8
      %s18 = scalar_lea.vmem %s0, %s17
      %s19 = sadd.s32 0, 0
      %p20 = scmp.lt.s32.totalorder %s19, 0
      %s21 = scalar_select %p20, %s19, 0
    $region5: #{tpu_custom_call.1} parent=1 // pred_fallthru
      _
    // Predicated region
    $region6: #{tpu_custom_call.1} parent=1 // pred_check
      _
    $region7: #{tpu_custom_call.1} parent=1 // pred_check_branch
      %23 = sbr.rel (0) target = $region9
    $region8: #{tpu_custom_call.1} parent=1 // pred_region
      %s24 = sadd.s32 0, 0
      %p25 = scmp.lt.s32.totalorder %s24, 0
      %s26 = scalar_select %p25, %s24, 0
      %s28 = ssub.s32 128, 128
      %29 = vsyncadd [#allocation3], %s28
      %s30 = smul.addr %s26, 128
      %s31 = scalar_lea.hbm %s1, %s30
      %s33 = sshll.u32 [#allocation2], 4
      %s34 = int_to_ptr.vmem [resolvable:$true] %s33
      %36 = dma.hbm_to_vmem [thread:$0]  %s31, 128, %s34, [#allocation3]
    $region9: #{tpu_custom_call.1} parent=1 // pred_fallthru
      _
    // Predicated region
    $region10: #{tpu_custom_call.1} parent=1 // pred_check
      _
    $region11: #{tpu_custom_call.1} parent=1 // pred_check_branch
      %38 = sbr.rel (0) target = $region13
    $region12: #{tpu_custom_call.1} parent=1 // pred_region
      %s39 = sadd.s32 0, 0
      %p40 = scmp.lt.s32.totalorder %s39, 0
      %s41 = scalar_select %p40, %s39, 0
      %p42 = scmp.lt.s32.totalorder %s41, 0
      %s43 = scalar_select %p42, %s41, 0
      %s44 = smul.addr %s43, 8
      %s45 = scalar_lea.vmem %s2, %s44
      %s46 = sadd.s32 0, 0
      %p47 = scmp.lt.s32.totalorder %s46, 0
      %s48 = scalar_select %p47, %s46, 0
    $region13: #{tpu_custom_call.1} parent=1 // pred_fallthru
      _
    // Predicated region
    $region14: #{tpu_custom_call.1} parent=1 // pred_check
      _
    $region15: #{tpu_custom_call.1} parent=1 // pred_check_branch
      %50 = sbr.rel (0) target = $region17
    $region16: #{tpu_custom_call.1} parent=1 // pred_region
      %51 = dma.done [#allocation3], 128
    $region17: #{tpu_custom_call.1} parent=1 // pred_fallthru
      _
    %s52 = sadd.s32 0, 0
    %p53 = scmp.lt.s32.totalorder %s52, 0
    %s54 = scalar_select %p53, %s52, 0
    %p55 = scmp.lt.s32.totalorder %s54, 0
    %s56 = scalar_select %p55, %s54, 0
    %s57 = smul.addr %s56, 8
    %s58 = scalar_lea.vmem %s0, %s57
    %s59 = sadd.s32 0, 0
    %p60 = scmp.lt.s32.totalorder %s59, 0
    %s61 = scalar_select %p60, %s59, 0
    %p62 = scmp.lt.s32.totalorder %s61, 0
    %s63 = scalar_select %p62, %s61, 0
    %s64 = smul.addr %s63, 8
    %s65 = scalar_lea.vmem %s2, %s64
    %s66 = sadd.s32 0, 0
    %p67 = scmp.lt.s32.totalorder %s66, 0
    %s68 = scalar_select %p67, %s66, 0
    %p69 = scmp.lt.s32.totalorder %s68, 0
    %s70 = scalar_select %p69, %s68, 0
    %s71 = smul.addr %s70, 8
    %s72 = scalar_lea.vmem %s0, %s71
    %s73 = sadd.s32 0, 0
    %p74 = scmp.lt.s32.totalorder %s73, 0
    %s75 = scalar_select %p74, %s73, 0
    %s76 = sadd.s32 0, 0
    %p77 = scmp.lt.s32.totalorder %s76, 0
    %s78 = scalar_select %p77, %s76, 0
    %s79 = sadd.s32 0, 0
    %p80 = scmp.lt.s32.totalorder %s79, 0
    %s81 = scalar_select %p80, %s79, 0
    %p82 = scmp.lt.s32.totalorder %s81, 0
    %s83 = scalar_select %p82, %s81, 0
    %s84 = smul.addr %s83, 8
    %s85 = scalar_lea.vmem %s2, %s84
    %s86 = sadd.s32 0, 0
    %p87 = scmp.lt.s32.totalorder %s86, 0
    %s88 = scalar_select %p87, %s86, 0
    %p89 = scmp.eq.s32.totalorder 0, 0
    // Predicated region
    $region18: #{tpu_custom_call.1} parent=1 // pred_check
      %p90 = pneg %p89
    $region19: #{tpu_custom_call.1} parent=1 // pred_check_branch
      %92 = sbr.rel (%p90) target = $region21
    $region20: #{tpu_custom_call.1} parent=1 // pred_region
      %vm93 = vcmask 0
      %94 = vst.msk [vmem:[#allocation5] sm:$0x1] %vm93, 0.0
    $region21: #{tpu_custom_call.1} parent=1 // pred_fallthru
      _
    %v95 = vld [vmem:[%s72] sm:$0xff]
    %v96 = vld [vmem:[#allocation2] sm:$0xff]
    %v97 = vld [vmem:[%s85] sm:$0xff]
    %v98 = vsub.f32 %v95, %v96
    %v99 = vadd.f32 %v98, 1e-06
    %v100 = vmul.f32 %v99, %v99
    %vm101 = vcmask 261120
    %v102 = vsel %vm101, %v100, 0.0
    %103 = vadd.xlane.f32.xlu0 %v102
    %v104 = vpop.xlane.xlu0 %103
    %v105 = vrsqrt.pop %v104
    %v106 = vmul.f32 %v104, %v105
    %vm107 = vcmp.eq.f32.partialorder %v104, inf
    %v108 = vsel %vm107, %v104, %v106
    %vm109 = vcmp.eq.f32.partialorder %v104, 0.0
    %v110 = vand.u32 %v104, 2147483648
    %v111 = vsel %vm109, %v110, %v108
    %v112 = vsub.f32 1.0, %v97
    %v113 = vmul.f32 %v112, %v104
    %v114 = vsub.f32 2.0, %v111
    %v115 = vmax.f32 %v114, 0.0
    %v116 = vmul.f32 %v115, %v115
    %v117 = vmul.f32 %v97, %v116
    %v118 = vadd.f32 %v113, %v117
    %v119 = vld [vmem:[#allocation5] sm:$0x1]
    %vm120 = vcmask 7168
    %v121 = vsel %vm120, %v118, 0.0
    %122 = vadd.xlane.f32.xlu0 %v121
    %v123 = vpop.xlane.xlu0 %122
    %v124 = vrot.slane %v123, 4
    %v125 = vadd.f32 %v123, %v124
    %v126 = vrot.slane %v125, 2
    %v127 = vadd.f32 %v125, %v126
    %v128 = vrot.slane %v127, 1
    %v129 = vadd.f32 %v127, %v128
    %s130 = vtos %v129
    %v131 = vstv %s130
    %v132 = vadd.f32 %v119, %v131
    %vm133 = vcmask 0
    %134 = vst.msk [vmem:[#allocation5] sm:$0x1] %vm133, %v132
    // Predicated region
    $region22: #{tpu_custom_call.1} parent=1 // pred_check
      %p135 = pneg %p89
    $region23: #{tpu_custom_call.1} parent=1 // pred_check_branch
      %137 = sbr.rel (%p135) target = $region25
    $region24: #{tpu_custom_call.1} parent=1 // pred_region
      %v138 = vld [vmem:[#allocation5] sm:$0x1]
      %v139 = vmul.f32 %v138, 0.125
      %140 = vst.msk [vmem:[#allocation5] sm:$0x1] %vm133, %v139
    $region25: #{tpu_custom_call.1} parent=1 // pred_fallthru
      _
    // Predicated region
    $region26: #{tpu_custom_call.1} parent=1 // pred_check
      _
    $region27: #{tpu_custom_call.1} parent=1 // pred_check_branch
      %142 = sbr.rel (0) target = $region29
    $region28: #{tpu_custom_call.1} parent=1 // pred_region
      %s144 = ssub.s32 16, 16
      %145 = vsyncadd [#allocation4], %s144
      %s147 = sshll.u32 [#allocation5], 4
      %s148 = int_to_ptr.vmem [resolvable:$true] %s147
      %150 = dma.vmem_to_hbm [thread:$0]  %s148, 16, %s3, [#allocation4]
    $region29: #{tpu_custom_call.1} parent=1 // pred_fallthru
      _
    // Predicated region
    $region30: #{tpu_custom_call.1} parent=1 // pred_check
      _
    $region31: #{tpu_custom_call.1} parent=1 // pred_check_branch
      %152 = sbr.rel (0) target = $region33
    $region32: #{tpu_custom_call.1} parent=1 // pred_region
      %153 = dma.done [#allocation4], 16
    $region33: #{tpu_custom_call.1} parent=1 // pred_fallthru
      _
    %154 = vsyncpa [#allocation3], 1
    %155 = vsyncpa [#allocation4], 1

</llo_original>
